<compile_context>
chip_gen: v6e
topology: v6e:2x2x1
jax: 0.10.0
libtpu: 0.0.40
codegen_flags: <defaults>
</compile_context>

<pallas_src>
import functools

import jax
import jax.numpy as jnp
import numpy as np
from jax.experimental import pallas as pl
from jax.experimental.pallas import tpu as pltpu


def _d4_table_kernel(idx_ref, out_ref):
    """Builds all 8 D4 regular-representation matrices, lane-packed.

    idx_ref: VMEM (1, 128) int32. Lane L carries the group index i of matrix
             m = L // 8 (value repeated over that matrix's 8 lanes).
    out_ref: VMEM (8, 128). out[k, m*8 + j] = M_m[k, j] (pattern repeats past
             lane 64; the wrapper keeps lanes 0..63).
    """
    i = idx_ref[...]                                             # (1, 128)

    # Lane-only arithmetic hoisted to a single sublane (perf-review item 1).
    lane = jax.lax.broadcasted_iota(jnp.int32, (1, 128), 1)      # (1, 128)
    j = lane & 7                                                 # column index

    ri, si = i & 3, i >> 2
    rj, sj = j & 3, j >> 2
    # Branch-free D4 product (bias +4 keeps the argument of &3 non-negative).
    prod = ((ri + (1 - 2 * si) * rj + 4) & 3) + ((si ^ sj) << 2)  # (1, 128)

    # Only the compare/cast runs at full output shape: one vreg, unmasked vst.
    k = jax.lax.broadcasted_iota(jnp.int32, out_ref.shape, 0)     # (8, 128)
    out_ref[...] = (k == prod).astype(out_ref.dtype)


@functools.lru_cache(maxsize=None)
def _d4_table(dtype_name: str):
    """One-time Pallas build of the (8, 8, 8) table: table[i, k, j] = M_i[k, j]."""
    dtype = jnp.dtype(dtype_name)
    # Lane L of the input carries the group index of matrix m = L // 8.
    idx_lanes = jnp.repeat(jnp.arange(16, dtype=jnp.int32) & 7, 8).reshape(1, 128)

    slab = pl.pallas_call(
        _d4_table_kernel,
        out_shape=jax.ShapeDtypeStruct((8, 128), dtype),
        in_specs=[pl.BlockSpec(memory_space=pltpu.MemorySpace.VMEM)],
        out_specs=pl.BlockSpec(memory_space=pltpu.MemorySpace.VMEM),
    )(idx_lanes)

    # slab[k, m*8 + j] -> table[m, k, j].  One-time ~2 KiB layout fixup.
    table = slab[:, :64].reshape(8, 8, 8).transpose(1, 0, 2)
    return jax.block_until_ready(table)


def d4_regular_representation(x, dtype=jnp.float32):
    """Forward pass of D4RegularRepresentation.

    x: int / 0-d array (group index 0..7)  -> (8, 8) matrix, or
       integer array of indices            -> matrices with that leading shape,
                                              e.g. (B,) -> (B, 8, 8).

    Note: out-of-range indices are clamped by the gather (the torch module
    would raise a KeyError instead).
    """
    table = _d4_table(jnp.dtype(dtype).name)
    x_arr = jnp.asarray(x, dtype=jnp.int32)
    # Gather writes the result exactly once -- no slab + transpose round trip.
    return jnp.take(table, x_arr, axis=0)


# ----- pure-Python reference (mirrors the torch module) -----
def _group_mult(i, j):
    if i < 4 and j < 4:
        return (i + j) % 4
    elif i < 4 and j >= 4:
        return 4 + (i + (j - 4)) % 4
    elif i >= 4 and j < 4:
        return 4 + ((i - 4) - j) % 4
    else:
        return ((i - 4) - (j - 4)) % 4


def _ref_matrix(i):
    M = np.zeros((8, 8), dtype=np.float32)
    for j in range(8):
        M[_group_mult(i, j), j] = 1.0
    return M


if __name__ == "__main__":
    key = jax.random.PRNGKey(0)
    k_scalar, k_batch = jax.random.split(key)

    # 1) Module's forward signature: a single integer group index in 0..7.
    x_scalar = int(jax.random.randint(k_scalar, (), 0, 8))
    M = jax.block_until_ready(d4_regular_representation(x_scalar))
    assert M.shape == (8, 8)
    np.testing.assert_array_equal(np.asarray(M), _ref_matrix(x_scalar))

    # 2) All 8 group elements: exhaustive check of the Pallas-built table.
    xs = jnp.arange(8, dtype=jnp.int32)
    Ms = jax.block_until_ready(d4_regular_representation(xs))
    assert Ms.shape == (8, 8, 8)
    for i in range(8):
        np.testing.assert_array_equal(np.asarray(Ms[i]), _ref_matrix(i))

    # 3) Random batch + bf16 output (gather path; cached table is reused).
    xb = jax.random.randint(k_batch, (32,), 0, 8)
    Mb = jax.block_until_ready(d4_regular_representation(xb, dtype=jnp.bfloat16))
    assert Mb.shape == (32, 8, 8)
    xb_np = np.asarray(xb)
    for b in range(32):
        np.testing.assert_array_equal(
            np.asarray(Mb[b].astype(jnp.float32)), _ref_matrix(int(xb_np[b]))
        )

    print("KERNEL_OK")
</pallas_src>

<mosaic_0001>
module attributes {stable_mosaic.version = 11 : i64} {
  func.func @_d4_table_kernel(%arg0: memref<1x128xi32, #tpu.memory_space<vmem>>, %arg1: memref<8x128xf32, #tpu.memory_space<vmem>>) attributes {dimension_semantics = [], scalar_prefetch = 0 : i64, scratch_operands = 0 : i64, tpu.core_type = #tpu.core_type<tc>} {
    %c0 = arith.constant 0 : index
    %c0_0 = arith.constant 0 : index
    %0 = vector.load %arg0[%c0, %c0_0] : memref<1x128xi32, #tpu.memory_space<vmem>>, vector<1x128xi32>
    %1 = tpu.iota {dimensions = array<i32: 1>} : vector<1x128xi32>
    %c7_i32 = arith.constant 7 : i32
    %2 = vector.broadcast %c7_i32 : i32 to vector<1x128xi32>
    %3 = arith.andi %1, %2 : vector<1x128xi32>
    %c3_i32 = arith.constant 3 : i32
    %4 = vector.broadcast %c3_i32 : i32 to vector<1x128xi32>
    %5 = arith.andi %0, %4 : vector<1x128xi32>
    %c2_i32 = arith.constant 2 : i32
    %6 = vector.broadcast %c2_i32 : i32 to vector<1x128xi32>
    %7 = arith.shrsi %0, %6 : vector<1x128xi32>
    %c3_i32_1 = arith.constant 3 : i32
    %8 = vector.broadcast %c3_i32_1 : i32 to vector<1x128xi32>
    %9 = arith.andi %3, %8 : vector<1x128xi32>
    %c2_i32_2 = arith.constant 2 : i32
    %10 = vector.broadcast %c2_i32_2 : i32 to vector<1x128xi32>
    %11 = arith.shrsi %3, %10 : vector<1x128xi32>
    %c2_i32_3 = arith.constant 2 : i32
    %12 = vector.broadcast %c2_i32_3 : i32 to vector<1x128xi32>
    %13 = arith.muli %12, %7 : vector<1x128xi32>
    %c1_i32 = arith.constant 1 : i32
    %14 = vector.broadcast %c1_i32 : i32 to vector<1x128xi32>
    %15 = arith.subi %14, %13 : vector<1x128xi32>
    %16 = arith.muli %15, %9 : vector<1x128xi32>
    %17 = arith.addi %5, %16 : vector<1x128xi32>
    %c4_i32 = arith.constant 4 : i32
    %18 = vector.broadcast %c4_i32 : i32 to vector<1x128xi32>
    %19 = arith.addi %17, %18 : vector<1x128xi32>
    %c3_i32_4 = arith.constant 3 : i32
    %20 = vector.broadcast %c3_i32_4 : i32 to vector<1x128xi32>
    %21 = arith.andi %19, %20 : vector<1x128xi32>
    %22 = arith.xori %7, %11 : vector<1x128xi32>
    %c2_i32_5 = arith.constant 2 : i32
    %23 = vector.broadcast %c2_i32_5 : i32 to vector<1x128xi32>
    %24 = arith.shli %22, %23 : vector<1x128xi32>
    %25 = arith.addi %21, %24 : vector<1x128xi32>
    %26 = tpu.iota {dimensions = array<i32: 0>} : vector<8x128xi32>
    %27 = vector.broadcast %25 : vector<1x128xi32> to vector<8x128xi32>
    %28 = arith.cmpi eq, %26, %27 : vector<8x128xi32>
    %29 = arith.extui %28 : vector<8x128xi1> to vector<8x128xi32>
    %30 = arith.sitofp %29 : vector<8x128xi32> to vector<8x128xf32>
    %c0_6 = arith.constant 0 : index
    %c0_7 = arith.constant 0 : index
    %31 = vector.load %arg1[%c0_6, %c0_7] : memref<8x128xf32, #tpu.memory_space<vmem>>, vector<8x128xf32>
    tpu.vector_store %arg1[%c0_6, %c0_7], %30 {strides = array<i32>} : memref<8x128xf32, #tpu.memory_space<vmem>>, vector<8x128xf32>,
    return
  }
}

</mosaic_0001>

<llo_original>
// kernel: tpu_custom_call.1
$region0: #{tpu_custom_call.1}
  #allocation0 [shape = 'u32[]', space=smem, size = 0x4, offset = 0x4, fixed_abs, tag = 'smem constant byte address 0x4 - core index']
  #allocation1 [shape = 'u32[144,128]{1,0:T(1,128)}', space=vmem, size = 0x12000, scoped, tag = 'internal scratch']
  %s0 = inlined_call_operand.hbm [shape: s32[1,128], index: 0, kind: input, shape index: {}]
  %s1 = inlined_call_operand.hbm [shape: f32[8,128], index: 1, kind: output, shape index: {}]
  %s2 = sld [smem:[#allocation0]]
  $region18: #{tpu_custom_call.1} parent=0
    _
  %s4 = ssub.s32 1, %s2
  %s5 = scalar_select 0, %s4, %s2
  $region1: #{tpu_custom_call.1} parent=0
    #allocation2 [shape = 'u8[512]{0}', space=vmem, size = 0x400, scoped, tag = 'input window, operand 0, single buffered']
    #allocation3 [shape = 's32[1]{0}', space=sflag, size = 0x4, scoped, tag = 'scoped memory for tpu_custom_call.1']
    #allocation4 [shape = 's32[1]{0}', space=sflag, size = 0x4, scoped, tag = 'scoped memory for tpu_custom_call.1']
    #allocation5 [shape = 'u8[4096]{0}', space=vmem, size = 0x1000, scoped, tag = 'output window, operand 0, single buffered']
    %6 = vsyncpa [#allocation3], 0
    %7 = vsyncpa [#allocation4], 0
    // Predicated region
    $region2: #{tpu_custom_call.1} parent=1 // pred_check
      _
    $region3: #{tpu_custom_call.1} parent=1 // pred_check_branch
      %9 = sbr.rel (0) target = $region5
    $region4: #{tpu_custom_call.1} parent=1 // pred_region
      %s11 = ssub.s32 16, 16
      %12 = vsyncadd [#allocation3], %s11
      %s14 = sshll.u32 [#allocation2], 4
      %s15 = int_to_ptr.vmem [resolvable:$true] %s14
      %17 = dma.hbm_to_vmem [thread:$0]  %s0, 16, %s15, [#allocation3]
    $region5: #{tpu_custom_call.1} parent=1 // pred_fallthru
      _
    // Predicated region
    $region6: #{tpu_custom_call.1} parent=1 // pred_check
      _
    $region7: #{tpu_custom_call.1} parent=1 // pred_check_branch
      %19 = sbr.rel (0) target = $region9
    $region8: #{tpu_custom_call.1} parent=1 // pred_region
      %20 = dma.done [#allocation3], 16
    $region9: #{tpu_custom_call.1} parent=1 // pred_fallthru
      _
    %v21 = vld [vmem:[#allocation2] sm:$0x1]
    %v22 = vlaneseq
    %v23 = vand.u32 %v22, 127
    %v24 = vand.u32 %v23, 7
    %v25 = vand.u32 %v21, 3
    %v26 = vshra.s32 %v21, 2
    %v27 = vand.u32 %v24, 3
    %v28 = vshra.s32 %v24, 2
    %v29 = vmul.u32 %v26, 2
    %v30 = vsub.s32 1, %v29
    %v31 = vmul.u32 %v30, %v27
    %v32 = vadd.s32 %v25, %v31
    %v33 = vadd.s32 %v32, 4
    %v34 = vand.u32 %v33, 3
    %v35 = vxor.u32 %v26, %v28
    %v36 = vshll.u32 %v35, 2
    %v37 = vadd.s32 %v34, %v36
    %v38 = vlaneseq
    %v39 = vshrl.u32 %v38, 7
    %v40 = vlaneseq
    %v41 = vshrl.u32 %v40, 7
    %v42 = vsub.s32 0, %v41
    %v43 = vrot.slane %v37, %v42
    %vm44 = vcmp.eq.s32.totalorder %v39, %v43
    %v45 = vsel %vm44, 1, 0
    %v46 = vcvt.s32.f32 %v45
    %47 = vst [vmem:[#allocation5] sm:$0xff] %v46
    // Predicated region
    $region10: #{tpu_custom_call.1} parent=1 // pred_check
      _
    $region11: #{tpu_custom_call.1} parent=1 // pred_check_branch
      %49 = sbr.rel (0) target = $region13
    $region12: #{tpu_custom_call.1} parent=1 // pred_region
      %s51 = ssub.s32 128, 128
      %52 = vsyncadd [#allocation4], %s51
      %s54 = sshll.u32 [#allocation5], 4
      %s55 = int_to_ptr.vmem [resolvable:$true] %s54
      %57 = dma.vmem_to_hbm [thread:$0]  %s55, 128, %s1, [#allocation4]
    $region13: #{tpu_custom_call.1} parent=1 // pred_fallthru
      _
    // Predicated region
    $region14: #{tpu_custom_call.1} parent=1 // pred_check
      _
    $region15: #{tpu_custom_call.1} parent=1 // pred_check_branch
      %59 = sbr.rel (0) target = $region17
    $region16: #{tpu_custom_call.1} parent=1 // pred_region
      %60 = dma.done [#allocation4], 128
    $region17: #{tpu_custom_call.1} parent=1 // pred_fallthru
      _
    %61 = vsyncpa [#allocation3], 1
    %62 = vsyncpa [#allocation4], 1

</llo_original>
